<compile_context>
chip_gen: v6e
topology: v6e:2x2x1
jax: 0.10.0
libtpu: 0.0.40
codegen_flags: <defaults>
</compile_context>

<pallas_src>
import functools

import jax
import jax.numpy as jnp
from jax.experimental import pallas as pl
from jax.experimental.pallas import tpu as pltpu


def _dice_sums_kernel(p_ref, t_ref, num_ref, den_ref, *,
                      cols, tn, tiles_per_split, needs_mask):
    """Accumulate per-row sum(p*t) and sum(p+t) over feature tiles."""
    k = pl.program_id(1)            # feature-reduction axis ("arbitrary", last)

    @pl.when(k == 0)
    def _():
        num_ref[...] = jnp.zeros_like(num_ref)
        den_ref[...] = jnp.zeros_like(den_ref)

    pv = p_ref[...].astype(jnp.float32)
    tv = t_ref[...].astype(jnp.float32)

    if needs_mask:
        s = pl.program_id(0)
        # Logical (un-clamped) column offset of this tile; columns past `cols`
        # (ragged tail / over-covered clamped tiles) are zeroed before summing.
        col0 = (s * tiles_per_split + k) * tn
        col = col0 + jax.lax.broadcasted_iota(jnp.int32, pv.shape, 1)
        valid = col < cols
        pv = jnp.where(valid, pv, 0.0)
        tv = jnp.where(valid, tv, 0.0)

    num_ref[...] += jnp.sum(pv * tv, axis=1, keepdims=True)[None]
    den_ref[...] += jnp.sum(pv + tv, axis=1, keepdims=True)[None]


def _pick_row_split(batch, n, itemsize):
    """Largest power-of-two r dividing n such that batch*r reaches sublane density."""
    target_rows = 8 if itemsize >= 4 else 16
    r = 1
    while batch * r < target_rows and n % (2 * r) == 0:
        r *= 2
    return r


def binary_dice_loss(predict, target, *, smooth=1.0, p=2, reduction="mean",
                     block_budget_bytes=16 * 1024 * 1024,
                     num_feature_splits=2):
    del p, reduction  # unused by the reference forward (see NOTE at top)
    assert predict.shape[0] == target.shape[0], "batch size mismatch"
    batch = predict.shape[0]

    pf = predict.reshape(batch, -1)
    tf = target.reshape(batch, -1)
    assert pf.shape == tf.shape, "predict & target element count mismatch"
    n = pf.shape[1]

    itemsize = min(pf.dtype.itemsize, tf.dtype.itemsize)
    r = _pick_row_split(batch, n, itemsize)
    rows = batch * r
    cols = n // r
    # Row-major compatible reshape: free, no extra HBM pass.
    pf = pf.reshape(rows, cols)
    tf = tf.reshape(rows, cols)

    # Feature-tile width from the VMEM budget:
    #   2 inputs x 2 pipeline buffers x rows_pad x tn x 4B (f32-conservative;
    #   also covers the in-kernel f32 upcast temp for sub-32-bit inputs).
    rows_pad = ((rows + 7) // 8) * 8
    bytes_per_col = 2 * 2 * rows_pad * 4
    tn_budget = max(128, (block_budget_bytes // bytes_per_col) // 128 * 128)

    if cols <= tn_budget:
        tn = cols                    # single full-extent block, no masking
    else:
        tn = tn_budget               # multiple of 128, tiled over features

    n_tiles = pl.cdiv(cols, tn)
    n_split = max(1, min(num_feature_splits, n_tiles))
    tiles_per_split = pl.cdiv(n_tiles, n_split)
    needs_mask = (n_split * tiles_per_split * tn) != cols
    last_tile = n_tiles - 1

    def feat_index_map(s, k):
        # Clamp so no block starts past the array edge; over-covered tiles are
        # zeroed by the in-kernel mask (their logical offset is >= cols).
        return (0, jnp.minimum(s * tiles_per_split + k, last_tile))

    kernel = functools.partial(
        _dice_sums_kernel, cols=cols, tn=tn,
        tiles_per_split=tiles_per_split, needs_mask=needs_mask)

    num_part, den_part = pl.pallas_call(
        kernel,
        out_shape=(jax.ShapeDtypeStruct((n_split, rows, 1), jnp.float32),
                   jax.ShapeDtypeStruct((n_split, rows, 1), jnp.float32)),
        grid_spec=pltpu.PrefetchScalarGridSpec(
            num_scalar_prefetch=0,
            grid=(n_split, tiles_per_split),
            in_specs=[
                pl.BlockSpec((rows, tn), feat_index_map),
                pl.BlockSpec((rows, tn), feat_index_map),
            ],
            out_specs=(
                pl.BlockSpec((1, rows, 1), lambda s, k: (s, 0, 0)),
                pl.BlockSpec((1, rows, 1), lambda s, k: (s, 0, 0)),
            ),
        ),
        compiler_params=pltpu.CompilerParams(
            dimension_semantics=("parallel", "arbitrary"),
            vmem_limit_bytes=32 * 1024 * 1024),
        cost_estimate=pl.CostEstimate(
            flops=3 * rows * cols,
            transcendentals=0,
            bytes_accessed=pf.size * pf.dtype.itemsize
                           + tf.size * tf.dtype.itemsize),
    )(pf, tf)

    # Tiny epilogue: collapse feature splits and row sub-splits, then the
    # dice / mean math on (B,) vectors.
    num = jnp.sum(num_part.reshape(n_split, batch, r), axis=(0, 2))
    den = jnp.sum(den_part.reshape(n_split, batch, r), axis=(0, 2))
    dice = 2.0 * num / (den + jnp.float32(smooth))
    return 1.0 - jnp.mean(dice)


def _reference(predict, target, smooth=1.0):
    b = predict.shape[0]
    pf = predict.reshape(b, -1).astype(jnp.float32)
    tf = target.reshape(b, -1).astype(jnp.float32)
    num = jnp.sum(pf * tf, axis=1)
    den = jnp.sum(pf, axis=1) + jnp.sum(tf, axis=1) + smooth
    return 1.0 - jnp.mean(2.0 * num / den)


if __name__ == "__main__":
    key = jax.random.PRNGKey(0)

    def make_inputs(shape, key, dtype=jnp.float32):
        k1, k2 = jax.random.split(key)
        pred = jax.nn.sigmoid(jax.random.normal(k1, shape, jnp.float32)).astype(dtype)
        targ = (jax.random.uniform(k2, shape) > 0.5).astype(dtype)
        return pred, targ

    # 1) Main small NCHW case (clean single-tile path).
    k0, k1, k2, k3 = jax.random.split(key, 4)
    pred, targ = make_inputs((2, 4, 16, 16), k0)
    loss = jax.block_until_ready(binary_dice_loss(pred, targ, smooth=1.0))
    ref = _reference(pred, targ, smooth=1.0)
    assert jnp.allclose(loss, ref, atol=1e-5, rtol=1e-5), (loss, ref)

    # 2) Forced multi-tile path: exercises the 2-way split, ragged-tail lane
    #    mask, clamped over-covered tile, and multi-step accumulation.
    pred2, targ2 = make_inputs((2, 5, 16, 16), k1)
    loss2 = jax.block_until_ready(
        binary_dice_loss(pred2, targ2, smooth=1.0, block_budget_bytes=16384))
    ref2 = _reference(pred2, targ2, smooth=1.0)
    assert jnp.allclose(loss2, ref2, atol=1e-5, rtol=1e-5), (loss2, ref2)

    # 3) Odd feature count: full-extent (non-128-multiple) block path.
    pred3, targ3 = make_inputs((2, 3, 10, 7), k2)
    loss3 = jax.block_until_ready(binary_dice_loss(pred3, targ3, smooth=1.0))
    ref3 = _reference(pred3, targ3, smooth=1.0)
    assert jnp.allclose(loss3, ref3, atol=1e-5, rtol=1e-5), (loss3, ref3)

    # 4) bfloat16 inputs: exercises the in-kernel per-tile f32 upcast and the
    #    16-row sublane-density target for sub-32-bit dtypes.
    pred4, targ4 = make_inputs((2, 4, 16, 16), k3, dtype=jnp.bfloat16)
    loss4 = jax.block_until_ready(binary_dice_loss(pred4, targ4, smooth=1.0))
    ref4 = _reference(pred4, targ4, smooth=1.0)
    assert jnp.allclose(loss4, ref4, atol=1e-3, rtol=1e-3), (loss4, ref4)

    print("KERNEL_OK")
</pallas_src>

<mosaic_0001>
module attributes {stable_mosaic.version = 11 : i64} {
  func.func @_dice_sums_kernel(%arg0: i32, %arg1: i32, %arg2: memref<8x256xf32, #tpu.memory_space<vmem>>, %arg3: memref<8x256xf32, #tpu.memory_space<vmem>>, %arg4: memref<1x8x1xf32, #tpu.memory_space<vmem>>, %arg5: memref<1x8x1xf32, #tpu.memory_space<vmem>>) attributes {dimension_semantics = [#tpu.dimension_semantics<parallel>, #tpu.dimension_semantics<arbitrary>], iteration_bounds = array<i64: 1, 1>, scalar_prefetch = 0 : i64, scratch_operands = 0 : i64, tpu.core_type = #tpu.core_type<tc>, window_params = [{transform_indices = @transform_0, window_bounds = array<i64: 8, 256>}, {transform_indices = @transform_1, window_bounds = array<i64: 8, 256>}, {transform_indices = @transform_2, window_bounds = array<i64: 1, 8, 1>}, {transform_indices = @transform_3, window_bounds = array<i64: 1, 8, 1>}]} {
    %c0_i32 = arith.constant 0 : i32
    %0 = arith.cmpi eq, %arg1, %c0_i32 : i32
    %1 = arith.extui %0 : i1 to i32
    %c0_i32_0 = arith.constant 0 : i32
    %2 = arith.cmpi ne, %1, %c0_i32_0 : i32
    scf.if %2 {
      %cst_17 = arith.constant 0.000000e+00 : f32
      %19 = vector.broadcast %cst_17 : f32 to vector<1x8x1xf32>
      %c0_18 = arith.constant 0 : index
      %c0_19 = arith.constant 0 : index
      %c0_20 = arith.constant 0 : index
      %20 = vector.load %arg4[%c0_18, %c0_19, %c0_20] : memref<1x8x1xf32, #tpu.memory_space<vmem>>, vector<1x8x1xf32>
      tpu.vector_store %arg4[%c0_18, %c0_19, %c0_20], %19 {strides = array<i32>} : memref<1x8x1xf32, #tpu.memory_space<vmem>>, vector<1x8x1xf32>,
      %cst_21 = arith.constant 0.000000e+00 : f32
      %21 = vector.broadcast %cst_21 : f32 to vector<1x8x1xf32>
      %c0_22 = arith.constant 0 : index
      %c0_23 = arith.constant 0 : index
      %c0_24 = arith.constant 0 : index
      %22 = vector.load %arg5[%c0_22, %c0_23, %c0_24] : memref<1x8x1xf32, #tpu.memory_space<vmem>>, vector<1x8x1xf32>
      tpu.vector_store %arg5[%c0_22, %c0_23, %c0_24], %21 {strides = array<i32>} : memref<1x8x1xf32, #tpu.memory_space<vmem>>, vector<1x8x1xf32>,
    } else {
    }
    %c0 = arith.constant 0 : index
    %c0_1 = arith.constant 0 : index
    %3 = vector.load %arg2[%c0, %c0_1] : memref<8x256xf32, #tpu.memory_space<vmem>>, vector<8x256xf32>
    %c0_2 = arith.constant 0 : index
    %c0_3 = arith.constant 0 : index
    %4 = vector.load %arg3[%c0_2, %c0_3] : memref<8x256xf32, #tpu.memory_space<vmem>>, vector<8x256xf32>
    %c0_4 = arith.constant 0 : index
    %c0_5 = arith.constant 0 : index
    %c0_6 = arith.constant 0 : index
    %5 = vector.load %arg4[%c0_4, %c0_5, %c0_6] : memref<1x8x1xf32, #tpu.memory_space<vmem>>, vector<1x8x1xf32>
    %6 = arith.mulf %3, %4 : vector<8x256xf32>
    %cst = arith.constant dense<0.000000e+00> : vector<8xf32>
    %7 = vector.multi_reduction <add>, %6, %cst [1] : vector<8x256xf32> to vector<8xf32>
    %8 = vector.shape_cast %7 : vector<8xf32> to vector<8x1xf32>
    %9 = vector.shape_cast %8 : vector<8x1xf32> to vector<1x8x1xf32>
    %10 = arith.addf %5, %9 : vector<1x8x1xf32>
    %c0_7 = arith.constant 0 : index
    %c0_8 = arith.constant 0 : index
    %c0_9 = arith.constant 0 : index
    %11 = vector.load %arg4[%c0_7, %c0_8, %c0_9] : memref<1x8x1xf32, #tpu.memory_space<vmem>>, vector<1x8x1xf32>
    tpu.vector_store %arg4[%c0_7, %c0_8, %c0_9], %10 {strides = array<i32>} : memref<1x8x1xf32, #tpu.memory_space<vmem>>, vector<1x8x1xf32>,
    %c0_10 = arith.constant 0 : index
    %c0_11 = arith.constant 0 : index
    %c0_12 = arith.constant 0 : index
    %12 = vector.load %arg5[%c0_10, %c0_11, %c0_12] : memref<1x8x1xf32, #tpu.memory_space<vmem>>, vector<1x8x1xf32>
    %13 = arith.addf %3, %4 : vector<8x256xf32>
    %cst_13 = arith.constant dense<0.000000e+00> : vector<8xf32>
    %14 = vector.multi_reduction <add>, %13, %cst_13 [1] : vector<8x256xf32> to vector<8xf32>
    %15 = vector.shape_cast %14 : vector<8xf32> to vector<8x1xf32>
    %16 = vector.shape_cast %15 : vector<8x1xf32> to vector<1x8x1xf32>
    %17 = arith.addf %12, %16 : vector<1x8x1xf32>
    %c0_14 = arith.constant 0 : index
    %c0_15 = arith.constant 0 : index
    %c0_16 = arith.constant 0 : index
    %18 = vector.load %arg5[%c0_14, %c0_15, %c0_16] : memref<1x8x1xf32, #tpu.memory_space<vmem>>, vector<1x8x1xf32>
    tpu.vector_store %arg5[%c0_14, %c0_15, %c0_16], %17 {strides = array<i32>} : memref<1x8x1xf32, #tpu.memory_space<vmem>>, vector<1x8x1xf32>,
    return
  }
  func.func @transform_0(%arg0: i32, %arg1: i32) -> (i32, i32) {
    %c1_i32 = arith.constant 1 : i32
    %0 = arith.muli %arg0, %c1_i32 : i32
    %1 = arith.addi %0, %arg1 : i32
    %c0_i32 = arith.constant 0 : i32
    %2 = arith.minsi %1, %c0_i32 : i32
    %c0_i32_0 = arith.constant 0 : i32
    %c0_i32_1 = arith.constant 0 : i32
    return %c0_i32_0, %2 : i32, i32
  }
  func.func @transform_1(%arg0: i32, %arg1: i32) -> (i32, i32) {
    %c1_i32 = arith.constant 1 : i32
    %0 = arith.muli %arg0, %c1_i32 : i32
    %1 = arith.addi %0, %arg1 : i32
    %c0_i32 = arith.constant 0 : i32
    %2 = arith.minsi %1, %c0_i32 : i32
    %c0_i32_0 = arith.constant 0 : i32
    %c0_i32_1 = arith.constant 0 : i32
    return %c0_i32_0, %2 : i32, i32
  }
  func.func @transform_2(%arg0: i32, %arg1: i32) -> (i32, i32, i32) {
    %c0_i32 = arith.constant 0 : i32
    %c0_i32_0 = arith.constant 0 : i32
    %c0_i32_1 = arith.constant 0 : i32
    return %arg0, %c0_i32, %c0_i32_0 : i32, i32, i32
  }
  func.func @transform_3(%arg0: i32, %arg1: i32) -> (i32, i32, i32) {
    %c0_i32 = arith.constant 0 : i32
    %c0_i32_0 = arith.constant 0 : i32
    %c0_i32_1 = arith.constant 0 : i32
    return %arg0, %c0_i32, %c0_i32_0 : i32, i32, i32
  }
}

</mosaic_0001>

<llo_original>
// kernel: tpu_custom_call.1
$region0: #{tpu_custom_call.1}
  #allocation0 [shape = 'u32[]', space=smem, size = 0x4, offset = 0x4, fixed_abs, tag = 'smem constant byte address 0x4 - core index']
  #allocation1 [shape = 'u32[144,128]{1,0:T(1,128)}', space=vmem, size = 0x12000, scoped, tag = 'internal scratch']
  %s0 = inlined_call_operand.hbm [shape: f32[8,256], index: 0, kind: input, shape index: {}]
  %s1 = inlined_call_operand.hbm [shape: f32[8,256], index: 1, kind: input, shape index: {}]
  %s2 = inlined_call_operand.vmem [shape: f32[1,8,1], index: 2, kind: output, shape index: {0}]
  %s3 = inlined_call_operand.vmem [shape: f32[1,8,1], index: 3, kind: output, shape index: {1}]
  %4 = xla_tuple %s2, %s3
  %s5 = sld [smem:[#allocation0]]
  $region38: #{tpu_custom_call.1} parent=0
    _
  %s7 = ssub.s32 1, %s5
  %s8 = scalar_select 0, %s7, %s5
  $region1: #{tpu_custom_call.1} parent=0
    #allocation2 [shape = 'u8[8192]{0}', space=vmem, size = 0x2000, scoped, tag = 'input window, operand 0, single buffered']
    #allocation3 [shape = 's32[1]{0}', space=sflag, size = 0x4, scoped, tag = 'scoped memory for tpu_custom_call.1']
    #allocation4 [shape = 'u8[8192]{0}', space=vmem, size = 0x2000, scoped, tag = 'input window, operand 1, single buffered']
    #allocation5 [shape = 's32[1]{0}', space=sflag, size = 0x4, scoped, tag = 'scoped memory for tpu_custom_call.1']
    %9 = vsyncpa [#allocation3], 0
    %10 = vsyncpa [#allocation5], 0
    // Predicated region
    $region2: #{tpu_custom_call.1} parent=1 // pred_check
      _
    $region3: #{tpu_custom_call.1} parent=1 // pred_check_branch
      %12 = sbr.rel (0) target = $region5
    $region4: #{tpu_custom_call.1} parent=1 // pred_region
      %s13 = sadd.s32 0, 0
      %p14 = scmp.lt.s32.totalorder %s13, 0
      %s15 = scalar_select %p14, %s13, 0
      %s16 = smul.u32 2, %s15
      %s18 = ssub.s32 256, 256
      %19 = vsyncadd [#allocation3], %s18
      %s20 = smul.addr %s16, 128
      %s21 = scalar_lea.hbm %s0, %s20
      %s23 = sshll.u32 [#allocation2], 4
      %s24 = int_to_ptr.vmem [resolvable:$true] %s23
      %26 = dma.hbm_to_vmem [thread:$0]  %s21, 256, %s24, [#allocation3]
    $region5: #{tpu_custom_call.1} parent=1 // pred_fallthru
      _
    // Predicated region
    $region6: #{tpu_custom_call.1} parent=1 // pred_check
      _
    $region7: #{tpu_custom_call.1} parent=1 // pred_check_branch
      %28 = sbr.rel (0) target = $region9
    $region8: #{tpu_custom_call.1} parent=1 // pred_region
      %s29 = sadd.s32 0, 0
      %p30 = scmp.lt.s32.totalorder %s29, 0
      %s31 = scalar_select %p30, %s29, 0
      %s32 = smul.u32 2, %s31
      %s34 = ssub.s32 256, 256
      %35 = vsyncadd [#allocation5], %s34
      %s36 = smul.addr %s32, 128
      %s37 = scalar_lea.hbm %s1, %s36
      %s39 = sshll.u32 [#allocation4], 4
      %s40 = int_to_ptr.vmem [resolvable:$true] %s39
      %42 = dma.hbm_to_vmem [thread:$0]  %s37, 256, %s40, [#allocation5]
    $region9: #{tpu_custom_call.1} parent=1 // pred_fallthru
      _
    // Predicated region
    $region10: #{tpu_custom_call.1} parent=1 // pred_check
      _
    $region11: #{tpu_custom_call.1} parent=1 // pred_check_branch
      %44 = sbr.rel (0) target = $region13
    $region12: #{tpu_custom_call.1} parent=1 // pred_region
      %45 = dma.done [#allocation3], 256
    $region13: #{tpu_custom_call.1} parent=1 // pred_fallthru
      _
    // Predicated region
    $region14: #{tpu_custom_call.1} parent=1 // pred_check
      _
    $region15: #{tpu_custom_call.1} parent=1 // pred_check_branch
      %47 = sbr.rel (0) target = $region17
    $region16: #{tpu_custom_call.1} parent=1 // pred_region
      %48 = dma.done [#allocation5], 256
    $region17: #{tpu_custom_call.1} parent=1 // pred_fallthru
      _
    %s49 = sadd.s32 0, 0
    %p50 = scmp.lt.s32.totalorder %s49, 0
    %s51 = scalar_select %p50, %s49, 0
    %s52 = smul.u32 2, %s51
    %s53 = sadd.s32 0, 0
    %p54 = scmp.lt.s32.totalorder %s53, 0
    %s55 = scalar_select %p54, %s53, 0
    %s56 = smul.u32 2, %s55
    %p57 = scmp.eq.s32.totalorder 0, 0
    // Predicated region
    $region18: #{tpu_custom_call.1} parent=1 // pred_check
      %p58 = pneg %p57
    $region19: #{tpu_custom_call.1} parent=1 // pred_check_branch
      %60 = sbr.rel (%p58) target = $region21
    $region20: #{tpu_custom_call.1} parent=1 // pred_region
      %vm61 = vcmask 7168
      %62 = vst.msk [vmem:[%s2] sm:$0xff] %vm61, 0.0
      %63 = vst.msk [vmem:[%s3] sm:$0xff] %vm61, 0.0
    $region21: #{tpu_custom_call.1} parent=1 // pred_fallthru
      _
    %v64 = vld [vmem:[#allocation2] sm:$0xff]
    %v65 = vld [vmem:[#allocation2 + $0x8] sm:$0xff]
    %v66 = vld [vmem:[#allocation4] sm:$0xff]
    %v67 = vld [vmem:[#allocation4 + $0x8] sm:$0xff]
    %v68 = vld [vmem:[%s2] sm:$0xff]
    %v69 = vmul.f32 %v64, %v66
    %v70 = vmul.f32 %v65, %v67
    %v71 = vadd.f32 %v69, %v70
    %72 = vadd.xlane.f32.xlu0 %v71
    %v73 = vpop.xlane.xlu0 %72
    %v74 = vadd.f32 %v68, %v73
    %vm75 = vcmask 7168
    %76 = vst.msk [vmem:[%s2] sm:$0xff] %vm75, %v74
    %v77 = vld [vmem:[%s3] sm:$0xff]
    %v78 = vadd.f32 %v64, %v66
    %v79 = vadd.f32 %v65, %v67
    %v80 = vadd.f32 %v78, %v79
    %81 = vadd.xlane.f32.xlu0 %v80
    %v82 = vpop.xlane.xlu0 %81
    %v83 = vadd.f32 %v77, %v82
    %84 = vst.msk [vmem:[%s3] sm:$0xff] %vm75, %v83
    // Predicated region
    $region22: #{tpu_custom_call.1} parent=1 // pred_check
      _
    $region23: #{tpu_custom_call.1} parent=1 // pred_check_branch
      %86 = sbr.rel (0) target = $region25
    $region24: #{tpu_custom_call.1} parent=1 // pred_region
      _
    $region25: #{tpu_custom_call.1} parent=1 // pred_fallthru
      _
    // Predicated region
    $region26: #{tpu_custom_call.1} parent=1 // pred_check
      _
    $region27: #{tpu_custom_call.1} parent=1 // pred_check_branch
      %88 = sbr.rel (0) target = $region29
    $region28: #{tpu_custom_call.1} parent=1 // pred_region
      _
    $region29: #{tpu_custom_call.1} parent=1 // pred_fallthru
      _
    // Predicated region
    $region30: #{tpu_custom_call.1} parent=1 // pred_check
      _
    $region31: #{tpu_custom_call.1} parent=1 // pred_check_branch
      %90 = sbr.rel (0) target = $region33
    $region32: #{tpu_custom_call.1} parent=1 // pred_region
      _
    $region33: #{tpu_custom_call.1} parent=1 // pred_fallthru
      _
    // Predicated region
    $region34: #{tpu_custom_call.1} parent=1 // pred_check
      _
    $region35: #{tpu_custom_call.1} parent=1 // pred_check_branch
      %92 = sbr.rel (0) target = $region37
    $region36: #{tpu_custom_call.1} parent=1 // pred_region
      _
    $region37: #{tpu_custom_call.1} parent=1 // pred_fallthru
      _
    %93 = vsyncpa [#allocation3], 1
    %94 = vsyncpa [#allocation5], 1

</llo_original>
